<compile_context>
chip_gen: v7x
topology: tpu7x:2x2x1
jax: 0.10.0
libtpu: 0.0.40
codegen_flags: <defaults>
</compile_context>

<pallas_src>
import functools

import jax
import jax.numpy as jnp
from jax.experimental import pallas as pl
from jax.experimental.pallas import tpu as pltpu


def _fused_sage_kernel(a_ref, x_ref, *rest, num_layers):
    """Fused multi-layer SAGEConv (+ ReLU between layers) on VMEM-resident tiles.

    rest = (w_l_0, w_r_0, b_0, ..., w_l_{L-1}, w_r_{L-1}, b_{L-1}, out_ref)
    """
    o_ref = rest[-1]
    layer_refs = rest[:-1]

    a = a_ref[...]                  # (Np, Np) bf16, row-normalized adjacency
    h = x_ref[...]                  # (Np, Fin) bf16, current activations
    y = None
    for l in range(num_layers):
        wl_ref, wr_ref, b_ref = layer_refs[3 * l:3 * l + 3]
        # mean-aggregated neighbor features: (Np, Np) @ (Np, F_l) -> f32
        agg = jnp.dot(a, h, preferred_element_type=jnp.float32)
        # lin_l(agg) + lin_r(h) + bias, all accumulated in f32
        y = jnp.dot(agg.astype(jnp.bfloat16), wl_ref[...],
                    preferred_element_type=jnp.float32)
        y = y + jnp.dot(h, wr_ref[...], preferred_element_type=jnp.float32)
        y = y + b_ref[...]          # (1, F_pad) f32 broadcasts over rows
        if l != num_layers - 1:
            # TODO(synk): F.dropout is identity for p=0.0 default; p>0 not implemented.
            y = jnp.maximum(y, 0.0)
            h = y.astype(jnp.bfloat16)
    o_ref[...] = y.astype(o_ref.dtype)


def _round_up(x, m):
    return (x + m - 1) // m * m


def build_mean_adjacency(edge_index, num_nodes):
    """Dense row-normalized adjacency: A[i, j] = 1/deg(i) for edge j -> i."""
    src = edge_index[0]
    dst = edge_index[1]
    counts = jnp.zeros((num_nodes, num_nodes), jnp.float32).at[dst, src].add(1.0)
    deg = counts.sum(axis=1, keepdims=True)
    return counts / jnp.maximum(deg, 1.0)


def init_sage_params(key, in_channels, out_channels, hidden=64, max_depth=2):
    """Glorot-ish init matching PyG SAGEConv parameter shapes.

    Each layer l: lin_l weight (stored transposed as (H_in, H_out)) with bias,
    lin_r weight (H_in, H_out) without bias.
    """
    dims = [in_channels] + [hidden] * (max_depth - 1) + [out_channels]
    params = []
    for l in range(max_depth):
        fin, fout = dims[l], dims[l + 1]
        key, k1, k2 = jax.random.split(key, 3)
        scale = 1.0 / jnp.sqrt(jnp.float32(fin))
        w_l = jax.random.uniform(k1, (fin, fout), jnp.float32, -scale, scale)
        w_r = jax.random.uniform(k2, (fin, fout), jnp.float32, -scale, scale)
        b = jnp.zeros((fout,), jnp.float32)
        params.append((w_l, w_r, b))
    return params


def sage_net_forward(x, edge_index, params, *, row_align=128, lane_align=128):
    """SAGE_Net.forward(x, edge_index) with dropout p=0.0 (module default)."""
    n, fin = x.shape
    out_channels = params[-1][0].shape[1]
    num_layers = len(params)

    n_pad = _round_up(n, row_align)

    # Dense row-normalized adjacency built at true size (exact f32 degrees),
    # then zero-padded and cast to bf16 for the MXU.  Zero-padded A rows/cols
    # mean padded nodes never contribute to real rows.
    a = build_mean_adjacency(edge_index, n)
    a_p = jnp.pad(a, ((0, n_pad - n), (0, n_pad - n))).astype(jnp.bfloat16)
    x_p = jnp.pad(x, ((0, n_pad - n), (0, 0))).astype(jnp.bfloat16)

    # Zero-pad every layer's output features to a multiple of 128 lanes so the
    # intermediate activation and the HBM output are lane-dense.  Input dims of
    # layer l are padded to match the padded output dim of layer l-1 (zero rows
    # multiply the zero-padded activation columns -> exact result preserved).
    padded = []
    prev_pad = fin
    for (w_l, w_r, b) in params:
        f_in, f_out = w_l.shape
        f_out_pad = _round_up(f_out, lane_align)
        wl_p = jnp.zeros((prev_pad, f_out_pad), jnp.float32).at[:f_in, :f_out].set(w_l)
        wr_p = jnp.zeros((prev_pad, f_out_pad), jnp.float32).at[:f_in, :f_out].set(w_r)
        b_p = jnp.zeros((1, f_out_pad), jnp.float32).at[0, :f_out].set(b)
        padded.append((wl_p.astype(jnp.bfloat16), wr_p.astype(jnp.bfloat16), b_p))
        prev_pad = f_out_pad
    out_pad = prev_pad

    kernel = functools.partial(_fused_sage_kernel, num_layers=num_layers)

    full = lambda i: (0, 0)
    in_specs = [pl.BlockSpec(a_p.shape, full), pl.BlockSpec(x_p.shape, full)]
    operands = [a_p, x_p]
    for (wl_p, wr_p, b_p) in padded:
        in_specs += [pl.BlockSpec(wl_p.shape, full),
                     pl.BlockSpec(wr_p.shape, full),
                     pl.BlockSpec(b_p.shape, full)]
        operands += [wl_p, wr_p, b_p]

    out_p = pl.pallas_call(
        kernel,
        out_shape=jax.ShapeDtypeStruct((n_pad, out_pad), jnp.float32),
        grid=(1,),
        in_specs=in_specs,
        out_specs=pl.BlockSpec((n_pad, out_pad), full),
        compiler_params=pltpu.CompilerParams(
            dimension_semantics=("arbitrary",)),
    )(*operands)

    return out_p[:n, :out_channels]


if __name__ == "__main__":
    key = jax.random.PRNGKey(0)

    num_nodes = 16
    in_channels = 8
    hidden = 32
    out_channels = 8
    max_depth = 2
    num_edges = 40

    key, kx, ks, kd = jax.random.split(key, 4)
    x = jax.random.normal(kx, (num_nodes, in_channels), jnp.float32)
    src = jax.random.randint(ks, (num_edges,), 0, num_nodes)
    dst = jax.random.randint(kd, (num_edges,), 0, num_nodes)
    edge_index = jnp.stack([src, dst], axis=0).astype(jnp.int32)

    params = init_sage_params(key, in_channels, out_channels,
                              hidden=hidden, max_depth=max_depth)

    out = sage_net_forward(x, edge_index, params)
    out = jax.block_until_ready(out)
    assert out.shape == (num_nodes, out_channels)

    print("KERNEL_OK")
</pallas_src>

<mosaic_0001>
module attributes {stable_mosaic.version = 11 : i64} {
  func.func @_fused_sage_kernel(%arg0: i32, %arg1: memref<128x128xbf16, #tpu.memory_space<vmem>>, %arg2: memref<128x8xbf16, #tpu.memory_space<vmem>>, %arg3: memref<8x128xbf16, #tpu.memory_space<vmem>>, %arg4: memref<8x128xbf16, #tpu.memory_space<vmem>>, %arg5: memref<1x128xf32, #tpu.memory_space<vmem>>, %arg6: memref<128x128xbf16, #tpu.memory_space<vmem>>, %arg7: memref<128x128xbf16, #tpu.memory_space<vmem>>, %arg8: memref<1x128xf32, #tpu.memory_space<vmem>>, %arg9: memref<128x128xf32, #tpu.memory_space<vmem>>) attributes {dimension_semantics = [#tpu.dimension_semantics<arbitrary>], iteration_bounds = array<i64: 1>, scalar_prefetch = 0 : i64, scratch_operands = 0 : i64, tpu.core_type = #tpu.core_type<tc>, window_params = [{pipeline_mode = #tpu.pipeline_mode<synchronous>, transform_indices = @transform_0, window_bounds = array<i64: 128, 128>}, {pipeline_mode = #tpu.pipeline_mode<synchronous>, transform_indices = @transform_1, window_bounds = array<i64: 128, 8>}, {pipeline_mode = #tpu.pipeline_mode<synchronous>, transform_indices = @transform_2, window_bounds = array<i64: 8, 128>}, {pipeline_mode = #tpu.pipeline_mode<synchronous>, transform_indices = @transform_3, window_bounds = array<i64: 8, 128>}, {pipeline_mode = #tpu.pipeline_mode<synchronous>, transform_indices = @transform_4, window_bounds = array<i64: 1, 128>}, {pipeline_mode = #tpu.pipeline_mode<synchronous>, transform_indices = @transform_5, window_bounds = array<i64: 128, 128>}, {pipeline_mode = #tpu.pipeline_mode<synchronous>, transform_indices = @transform_6, window_bounds = array<i64: 128, 128>}, {pipeline_mode = #tpu.pipeline_mode<synchronous>, transform_indices = @transform_7, window_bounds = array<i64: 1, 128>}, {pipeline_mode = #tpu.pipeline_mode<synchronous>, transform_indices = @transform_8, window_bounds = array<i64: 128, 128>}]} {
    %c0 = arith.constant 0 : index
    %c0_0 = arith.constant 0 : index
    %0 = vector.load %arg1[%c0, %c0_0] : memref<128x128xbf16, #tpu.memory_space<vmem>>, vector<128x128xbf16>
    %c0_1 = arith.constant 0 : index
    %c0_2 = arith.constant 0 : index
    %1 = vector.load %arg2[%c0_1, %c0_2] : memref<128x8xbf16, #tpu.memory_space<vmem>>, vector<128x8xbf16>
    %cst = arith.constant dense<0.000000e+00> : vector<128x8xf32>
    %2 = tpu.matmul %0, %1, %cst {dimension_numbers = #tpu.dot_dimension_numbers<[1], [0], [0], [1], [0, 0, 1, 1], [], []>} : vector<128x128xbf16>, vector<128x8xbf16>, vector<128x8xf32> -> vector<128x8xf32>
    %3 = arith.truncf %2 : vector<128x8xf32> to vector<128x8xbf16>
    %c0_3 = arith.constant 0 : index
    %c0_4 = arith.constant 0 : index
    %4 = vector.load %arg3[%c0_3, %c0_4] : memref<8x128xbf16, #tpu.memory_space<vmem>>, vector<8x128xbf16>
    %cst_5 = arith.constant dense<0.000000e+00> : vector<128x128xf32>
    %5 = tpu.matmul %3, %4, %cst_5 {dimension_numbers = #tpu.dot_dimension_numbers<[1], [0], [0], [1], [0, 0, 1, 1], [], []>} : vector<128x8xbf16>, vector<8x128xbf16>, vector<128x128xf32> -> vector<128x128xf32>
    %c0_6 = arith.constant 0 : index
    %c0_7 = arith.constant 0 : index
    %6 = vector.load %arg4[%c0_6, %c0_7] : memref<8x128xbf16, #tpu.memory_space<vmem>>, vector<8x128xbf16>
    %cst_8 = arith.constant dense<0.000000e+00> : vector<128x128xf32>
    %7 = tpu.matmul %1, %6, %cst_8 {dimension_numbers = #tpu.dot_dimension_numbers<[1], [0], [0], [1], [0, 0, 1, 1], [], []>} : vector<128x8xbf16>, vector<8x128xbf16>, vector<128x128xf32> -> vector<128x128xf32>
    %8 = arith.addf %5, %7 : vector<128x128xf32>
    %c0_9 = arith.constant 0 : index
    %c0_10 = arith.constant 0 : index
    %9 = vector.load %arg5[%c0_9, %c0_10] : memref<1x128xf32, #tpu.memory_space<vmem>>, vector<1x128xf32>
    %10 = vector.broadcast %9 : vector<1x128xf32> to vector<128x128xf32>
    %11 = arith.addf %8, %10 : vector<128x128xf32>
    %cst_11 = arith.constant 0.000000e+00 : f32
    %12 = vector.broadcast %cst_11 : f32 to vector<128x128xf32>
    %13 = arith.maximumf %11, %12 : vector<128x128xf32>
    %14 = arith.truncf %13 : vector<128x128xf32> to vector<128x128xbf16>
    %cst_12 = arith.constant dense<0.000000e+00> : vector<128x128xf32>
    %15 = tpu.matmul %0, %14, %cst_12 {dimension_numbers = #tpu.dot_dimension_numbers<[1], [0], [0], [1], [0, 0, 1, 1], [], []>} : vector<128x128xbf16>, vector<128x128xbf16>, vector<128x128xf32> -> vector<128x128xf32>
    %16 = arith.truncf %15 : vector<128x128xf32> to vector<128x128xbf16>
    %c0_13 = arith.constant 0 : index
    %c0_14 = arith.constant 0 : index
    %17 = vector.load %arg6[%c0_13, %c0_14] : memref<128x128xbf16, #tpu.memory_space<vmem>>, vector<128x128xbf16>
    %cst_15 = arith.constant dense<0.000000e+00> : vector<128x128xf32>
    %18 = tpu.matmul %16, %17, %cst_15 {dimension_numbers = #tpu.dot_dimension_numbers<[1], [0], [0], [1], [0, 0, 1, 1], [], []>} : vector<128x128xbf16>, vector<128x128xbf16>, vector<128x128xf32> -> vector<128x128xf32>
    %c0_16 = arith.constant 0 : index
    %c0_17 = arith.constant 0 : index
    %19 = vector.load %arg7[%c0_16, %c0_17] : memref<128x128xbf16, #tpu.memory_space<vmem>>, vector<128x128xbf16>
    %cst_18 = arith.constant dense<0.000000e+00> : vector<128x128xf32>
    %20 = tpu.matmul %14, %19, %cst_18 {dimension_numbers = #tpu.dot_dimension_numbers<[1], [0], [0], [1], [0, 0, 1, 1], [], []>} : vector<128x128xbf16>, vector<128x128xbf16>, vector<128x128xf32> -> vector<128x128xf32>
    %21 = arith.addf %18, %20 : vector<128x128xf32>
    %c0_19 = arith.constant 0 : index
    %c0_20 = arith.constant 0 : index
    %22 = vector.load %arg8[%c0_19, %c0_20] : memref<1x128xf32, #tpu.memory_space<vmem>>, vector<1x128xf32>
    %23 = vector.broadcast %22 : vector<1x128xf32> to vector<128x128xf32>
    %24 = arith.addf %21, %23 : vector<128x128xf32>
    %c0_21 = arith.constant 0 : index
    %c0_22 = arith.constant 0 : index
    %25 = vector.load %arg9[%c0_21, %c0_22] : memref<128x128xf32, #tpu.memory_space<vmem>>, vector<128x128xf32>
    tpu.vector_store %arg9[%c0_21, %c0_22], %24 {strides = array<i32>} : memref<128x128xf32, #tpu.memory_space<vmem>>, vector<128x128xf32>,
    return
  }
  func.func @transform_0(%arg0: i32) -> (i32, i32) {
    %c0_i32 = arith.constant 0 : i32
    %c0_i32_0 = arith.constant 0 : i32
    %c0_i32_1 = arith.constant 0 : i32
    return %c0_i32, %c0_i32_0 : i32, i32
  }
  func.func @transform_1(%arg0: i32) -> (i32, i32) {
    %c0_i32 = arith.constant 0 : i32
    %c0_i32_0 = arith.constant 0 : i32
    %c0_i32_1 = arith.constant 0 : i32
    return %c0_i32, %c0_i32_0 : i32, i32
  }
  func.func @transform_2(%arg0: i32) -> (i32, i32) {
    %c0_i32 = arith.constant 0 : i32
    %c0_i32_0 = arith.constant 0 : i32
    %c0_i32_1 = arith.constant 0 : i32
    return %c0_i32, %c0_i32_0 : i32, i32
  }
  func.func @transform_3(%arg0: i32) -> (i32, i32) {
    %c0_i32 = arith.constant 0 : i32
    %c0_i32_0 = arith.constant 0 : i32
    %c0_i32_1 = arith.constant 0 : i32
    return %c0_i32, %c0_i32_0 : i32, i32
  }
  func.func @transform_4(%arg0: i32) -> (i32, i32) {
    %c0_i32 = arith.constant 0 : i32
    %c0_i32_0 = arith.constant 0 : i32
    %c0_i32_1 = arith.constant 0 : i32
    return %c0_i32, %c0_i32_0 : i32, i32
  }
  func.func @transform_5(%arg0: i32) -> (i32, i32) {
    %c0_i32 = arith.constant 0 : i32
    %c0_i32_0 = arith.constant 0 : i32
    %c0_i32_1 = arith.constant 0 : i32
    return %c0_i32, %c0_i32_0 : i32, i32
  }
  func.func @transform_6(%arg0: i32) -> (i32, i32) {
    %c0_i32 = arith.constant 0 : i32
    %c0_i32_0 = arith.constant 0 : i32
    %c0_i32_1 = arith.constant 0 : i32
    return %c0_i32, %c0_i32_0 : i32, i32
  }
  func.func @transform_7(%arg0: i32) -> (i32, i32) {
    %c0_i32 = arith.constant 0 : i32
    %c0_i32_0 = arith.constant 0 : i32
    %c0_i32_1 = arith.constant 0 : i32
    return %c0_i32, %c0_i32_0 : i32, i32
  }
  func.func @transform_8(%arg0: i32) -> (i32, i32) {
    %c0_i32 = arith.constant 0 : i32
    %c0_i32_0 = arith.constant 0 : i32
    %c0_i32_1 = arith.constant 0 : i32
    return %c0_i32, %c0_i32_0 : i32, i32
  }
}

</mosaic_0001>

<llo_original>
// kernel: tpu_custom_call.1
$region0: #{tpu_custom_call.1}
  #allocation0 [shape = 'u32[]', space=smem, size = 0x4, offset = 0x4, fixed_abs, tag = 'smem constant byte address 0x4 - core index']
  #allocation1 [shape = 'u32[144,128]{1,0:T(1,128)}', space=vmem, size = 0x12000, scoped, tag = 'internal scratch']
  %s0 = inlined_call_operand.vmem [shape: bf16[128,128], index: 0, kind: input, shape index: {}]
  %s1 = inlined_call_operand.vmem [shape: bf16[128,8], index: 1, kind: input, shape index: {}]
  %s2 = inlined_call_operand.vmem [shape: bf16[8,128], index: 2, kind: input, shape index: {}]
  %s3 = inlined_call_operand.vmem [shape: bf16[8,128], index: 3, kind: input, shape index: {}]
  %s4 = inlined_call_operand.vmem [shape: f32[1,128], index: 4, kind: input, shape index: {}]
  %s5 = inlined_call_operand.hbm [shape: bf16[128,128], index: 5, kind: input, shape index: {}]
  %s6 = inlined_call_operand.hbm [shape: bf16[128,128], index: 6, kind: input, shape index: {}]
  %s7 = inlined_call_operand.vmem [shape: f32[1,128], index: 7, kind: input, shape index: {}]
  %s8 = inlined_call_operand.hbm [shape: f32[128,128], index: 8, kind: output, shape index: {}]
  %s9 = sld [smem:[#allocation0]]
  $region50: #{tpu_custom_call.1} parent=0
    _
  %s11 = ssub.s32 1, %s9
  %s12 = scalar_select 0, %s11, %s9
  $region1: #{tpu_custom_call.1} parent=0
    #allocation2 [shape = 'u8[32768]{0}', space=vmem, size = 0x8000, scoped, tag = 'input window, operand 5, single buffered']
    #allocation3 [shape = 's32[1]{0}', space=sflag, size = 0x4, scoped, tag = 'scoped memory for tpu_custom_call.1']
    #allocation4 [shape = 's32[1]{0}', space=sflag, size = 0x4, scoped, tag = 'scoped memory for tpu_custom_call.1']
    #allocation5 [shape = 'u8[32768]{0}', space=vmem, size = 0x8000, scoped, tag = 'input window, operand 6, single buffered']
    #allocation6 [shape = 's32[1]{0}', space=sflag, size = 0x4, scoped, tag = 'scoped memory for tpu_custom_call.1']
    #allocation7 [shape = 'u8[65536]{0}', space=vmem, size = 0x10000, scoped, tag = 'output window, operand 0, single buffered']
    %13 = vsyncpa [#allocation3], 0
    %14 = vsyncpa [#allocation6], 0
    %15 = vsyncpa [#allocation4], 0
    // Predicated region
    $region2: #{tpu_custom_call.1} parent=1 // pred_check
      _
    $region3: #{tpu_custom_call.1} parent=1 // pred_check_branch
      %17 = sbr.rel (0) target = $region5
    $region4: #{tpu_custom_call.1} parent=1 // pred_region
      _
    $region5: #{tpu_custom_call.1} parent=1 // pred_fallthru
      _
    // Predicated region
    $region6: #{tpu_custom_call.1} parent=1 // pred_check
      _
    $region7: #{tpu_custom_call.1} parent=1 // pred_check_branch
      %19 = sbr.rel (0) target = $region9
    $region8: #{tpu_custom_call.1} parent=1 // pred_region
      _
    $region9: #{tpu_custom_call.1} parent=1 // pred_fallthru
      _
    // Predicated region
    $region10: #{tpu_custom_call.1} parent=1 // pred_check
      _
    $region11: #{tpu_custom_call.1} parent=1 // pred_check_branch
      %21 = sbr.rel (0) target = $region13
    $region12: #{tpu_custom_call.1} parent=1 // pred_region
      _
    $region13: #{tpu_custom_call.1} parent=1 // pred_fallthru
      _
    // Predicated region
    $region14: #{tpu_custom_call.1} parent=1 // pred_check
      _
    $region15: #{tpu_custom_call.1} parent=1 // pred_check_branch
      %23 = sbr.rel (0) target = $region17
    $region16: #{tpu_custom_call.1} parent=1 // pred_region
      _
    $region17: #{tpu_custom_call.1} parent=1 // pred_fallthru
      _
    // Predicated region
    $region18: #{tpu_custom_call.1} parent=1 // pred_check
      _
    $region19: #{tpu_custom_call.1} parent=1 // pred_check_branch
      %25 = sbr.rel (0) target = $region21
    $region20: #{tpu_custom_call.1} parent=1 // pred_region
      _
    $region21: #{tpu_custom_call.1} parent=1 // pred_fallthru
      _
    // Predicated region
    $region22: #{tpu_custom_call.1} parent=1 // pred_check
      _
    $region23: #{tpu_custom_call.1} parent=1 // pred_check_branch
      %27 = sbr.rel (0) target = $region25
    $region24: #{tpu_custom_call.1} parent=1 // pred_region
      %s29 = ssub.s32 1024, 1024
      %30 = vsyncadd [#allocation3], %s29
      %s31 = sshll.u32 [#allocation2], 4
      %s32 = int_to_ptr.vmem [resolvable:$true] %s31
      %37 = dma.hbm_to_vmem [thread:$0]  %s5, 1024, %s32, [#allocation3], 64, 64, 4
    $region25: #{tpu_custom_call.1} parent=1 // pred_fallthru
      _
    // Predicated region
    $region26: #{tpu_custom_call.1} parent=1 // pred_check
      _
    $region27: #{tpu_custom_call.1} parent=1 // pred_check_branch
      %39 = sbr.rel (0) target = $region29
    $region28: #{tpu_custom_call.1} parent=1 // pred_region
      %s41 = ssub.s32 1024, 1024
      %42 = vsyncadd [#allocation6], %s41
      %s43 = sshll.u32 [#allocation5], 4
      %s44 = int_to_ptr.vmem [resolvable:$true] %s43
      %49 = dma.hbm_to_vmem [thread:$0]  %s6, 1024, %s44, [#allocation6], 64, 64, 4
    $region29: #{tpu_custom_call.1} parent=1 // pred_fallthru
      _
    // Predicated region
    $region30: #{tpu_custom_call.1} parent=1 // pred_check
      _
    $region31: #{tpu_custom_call.1} parent=1 // pred_check_branch
      %51 = sbr.rel (0) target = $region33
    $region32: #{tpu_custom_call.1} parent=1 // pred_region
      _
    $region33: #{tpu_custom_call.1} parent=1 // pred_fallthru
      _
    // Predicated region
    $region34: #{tpu_custom_call.1} parent=1 // pred_check
      _
    $region35: #{tpu_custom_call.1} parent=1 // pred_check_branch
      %53 = sbr.rel (0) target = $region37
    $region36: #{tpu_custom_call.1} parent=1 // pred_region
      %54 = dma.done [#allocation3], 1024
    $region37: #{tpu_custom_call.1} parent=1 // pred_fallthru
      _
    // Predicated region
    $region38: #{tpu_custom_call.1} parent=1 // pred_check
      _
    $region39: #{tpu_custom_call.1} parent=1 // pred_check_branch
      %56 = sbr.rel (0) target = $region41
    $region40: #{tpu_custom_call.1} parent=1 // pred_region
      %57 = dma.done [#allocation6], 1024
    $region41: #{tpu_custom_call.1} parent=1 // pred_fallthru
      _
    %v59 = vld [vmem:[%s0] sm:$0xf]
    %v60 = vld [vmem:[%s0 + $0x4] sm:$0xf]
    %v61 = vld [vmem:[%s0 + $0x8] sm:$0xf]
    %v62 = vld [vmem:[%s0 + $0xc] sm:$0xf]
    %v63 = vld [vmem:[%s0 + $0x10] sm:$0xf]
    %v64 = vld [vmem:[%s0 + $0x14] sm:$0xf]
    %v65 = vld [vmem:[%s0 + $0x18] sm:$0xf]
    %v66 = vld [vmem:[%s0 + $0x1c] sm:$0xf]
    %v67 = vld [vmem:[%s0 + $0x20] sm:$0xf]
    %v68 = vld [vmem:[%s0 + $0x24] sm:$0xf]
    %v69 = vld [vmem:[%s0 + $0x28] sm:$0xf]
    %v70 = vld [vmem:[%s0 + $0x2c] sm:$0xf]
    %v71 = vld [vmem:[%s0 + $0x30] sm:$0xf]
    %v72 = vld [vmem:[%s0 + $0x34] sm:$0xf]
    %v73 = vld [vmem:[%s0 + $0x38] sm:$0xf]
    %v74 = vld [vmem:[%s0 + $0x3c] sm:$0xf]
    %v75 = vld [vmem:[%s1] sm:$0xf]
    %v76 = vld [vmem:[%s1 + $0x4] sm:$0xf]
    %v77 = vld [vmem:[%s1 + $0x8] sm:$0xf]
    %v78 = vld [vmem:[%s1 + $0xc] sm:$0xf]
    %v79 = vld [vmem:[%s1 + $0x10] sm:$0xf]
    %v80 = vld [vmem:[%s1 + $0x14] sm:$0xf]
    %v81 = vld [vmem:[%s1 + $0x18] sm:$0xf]
    %v82 = vld [vmem:[%s1 + $0x1c] sm:$0xf]
    %v83 = vld [vmem:[%s1 + $0x20] sm:$0xf]
    %v84 = vld [vmem:[%s1 + $0x24] sm:$0xf]
    %v85 = vld [vmem:[%s1 + $0x28] sm:$0xf]
    %v86 = vld [vmem:[%s1 + $0x2c] sm:$0xf]
    %v87 = vld [vmem:[%s1 + $0x30] sm:$0xf]
    %v88 = vld [vmem:[%s1 + $0x34] sm:$0xf]
    %v89 = vld [vmem:[%s1 + $0x38] sm:$0xf]
    %v90 = vld [vmem:[%s1 + $0x3c] sm:$0xf]
    %v107 = vunpack.c.l.b16 %v59
    %v108 = vunpack.c.l.b16 %v60
    %v109 = vunpack.c.l.b16 %v61
    %v110 = vunpack.c.l.b16 %v62
    %v111 = vunpack.c.l.b16 %v63
    %v112 = vunpack.c.l.b16 %v64
    %v113 = vunpack.c.l.b16 %v65
    %v114 = vunpack.c.l.b16 %v66
    %v115 = vunpack.c.l.b16 %v67
    %v116 = vunpack.c.l.b16 %v68
    %v117 = vunpack.c.l.b16 %v69
    %v118 = vunpack.c.l.b16 %v70
    %v119 = vunpack.c.l.b16 %v71
    %v120 = vunpack.c.l.b16 %v72
    %v121 = vunpack.c.l.b16 %v73
    %v122 = vunpack.c.l.b16 %v74
    %v123 = vpack.c.b16 %v108, %v107
    %v124 = vpack.c.b16 %v110, %v109
    %v125 = vpack.c.b16 %v112, %v111
    %v126 = vpack.c.b16 %v114, %v113
    %v127 = vpack.c.b16 %v116, %v115
    %v128 = vpack.c.b16 %v118, %v117
    %v129 = vpack.c.b16 %v120, %v119
    %v130 = vpack.c.b16 %v122, %v121
    %v155 = vunpack.c.l.b16 %v75
    %v156 = vunpack.c.l.b16 %v76
    %v157 = vunpack.c.l.b16 %v77
    %v158 = vunpack.c.l.b16 %v78
    %v159 = vunpack.c.l.b16 %v79
    %v160 = vunpack.c.l.b16 %v80
    %v161 = vunpack.c.l.b16 %v81
    %v162 = vunpack.c.l.b16 %v82
    %v163 = vunpack.c.l.b16 %v83
    %v164 = vunpack.c.l.b16 %v84
    %v165 = vunpack.c.l.b16 %v85
    %v166 = vunpack.c.l.b16 %v86
    %v167 = vunpack.c.l.b16 %v87
    %v168 = vunpack.c.l.b16 %v88
    %v169 = vunpack.c.l.b16 %v89
    %v170 = vunpack.c.l.b16 %v90
    %v171 = vpack.c.b16 %v156, %v155
    %v172 = vpack.c.b16 %v158, %v157
    %v173 = vpack.c.b16 %v160, %v159
    %v174 = vpack.c.b16 %v162, %v161
    %v175 = vpack.c.b16 %v164, %v163
    %v176 = vpack.c.b16 %v166, %v165
    %v177 = vpack.c.b16 %v168, %v167
    %v178 = vpack.c.b16 %v170, %v169
    %187 = vmatprep.subr.bf16.mxu0 0
    %188 = vmatpush1.bf16.msra.mxu0 %v171
    %189 = vmatprep.subr.bf16.mxu0 0
    %190 = vmatpush1.bf16.msra.mxu0 %v172
    %191 = vmatprep.subr.bf16.mxu0 0
    %192 = vmatpush1.bf16.msra.mxu0 %v173
    %193 = vmatprep.subr.bf16.mxu0 0
    %194 = vmatpush1.bf16.msra.mxu0 %v174
    %195 = vmatprep.subr.bf16.mxu0 0
    %196 = vmatpush1.bf16.msra.mxu0 %v175
    %197 = vmatprep.subr.bf16.mxu0 0
    %198 = vmatpush1.bf16.msra.mxu0 %v176
    %199 = vmatprep.subr.bf16.mxu0 0
    %200 = vmatpush1.bf16.msra.mxu0 %v177
    %201 = vmatprep.subr.bf16.mxu0 0
    %202 = vmatpush1.bf16.msra.mxu0 %v178
    %203 = vmatprep.subr.bf16.mxu0 0
    %204 = vmatpush1.bf16.msra.mxu0 0
    %205 = vmatprep.subr.bf16.mxu0 0
    %206 = vmatpush1.bf16.msra.mxu0 0
    %207 = vmatprep.subr.bf16.mxu0 0
    %208 = vmatpush1.bf16.msra.mxu0 0
    %209 = vmatprep.subr.bf16.mxu0 0
    %210 = vmatpush1.bf16.msra.mxu0 0
    %211 = vmatprep.subr.bf16.mxu0 0
    %212 = vmatpush1.bf16.msra.mxu0 0
    %213 = vmatprep.subr.bf16.mxu0 0
    %214 = vmatpush1.bf16.msra.mxu0 0
    %215 = vmatprep.subr.bf16.mxu0 0
    %216 = vmatpush1.bf16.msra.mxu0 0
    %217 = vmatprep.subr.bf16.mxu0 0
    %218 = vmatpush1.bf16.msra.mxu0 0
    %219 = vmatprep.mubr.bf16.mxu0 0
    %220 = vmatmul.mubr.bf16.gmra.mrb[0].mxu0 %v123
    %v221 = vpop.f32.mrb[0].mxu0
    %v222 = vadd.f32 0.0, %v221
    %v223 = vpop.f32.mrb[0].mxu0
    %v224 = vpop.f32.mrb[0].mxu0
    %v225 = vadd.f32 0.0, %v224
    %v226 = vpop.f32.mrb[0].mxu0
    %227 = vmatprep.mubr.bf16.mxu0 0
    %228 = vmatmul.mubr.bf16.gmra.mrb[0].mxu0 %v124
    %v229 = vpop.f32.mrb[0].mxu0
    %v230 = vadd.f32 0.0, %v229
    %v231 = vpop.f32.mrb[0].mxu0
    %v232 = vpop.f32.mrb[0].mxu0
    %v233 = vadd.f32 0.0, %v232
    %v234 = vpop.f32.mrb[0].mxu0
    %235 = vmatprep.mubr.bf16.mxu0 0
    %236 = vmatmul.mubr.bf16.gmra.mrb[0].mxu0 %v125
    %v237 = vpop.f32.mrb[0].mxu0
    %v238 = vadd.f32 0.0, %v237
    %v239 = vpop.f32.mrb[0].mxu0
    %v240 = vpop.f32.mrb[0].mxu0
    %v241 = vadd.f32 0.0, %v240
    %v242 = vpop.f32.mrb[0].mxu0
    %243 = vmatprep.mubr.bf16.mxu0 0
    %244 = vmatmul.mubr.bf16.gmra.mrb[0].mxu0 %v126
    %v245 = vpop.f32.mrb[0].mxu0
    %v246 = vadd.f32 0.0, %v245
    %v247 = vpop.f32.mrb[0].mxu0
    %v248 = vpop.f32.mrb[0].mxu0
    %v249 = vadd.f32 0.0, %v248
    %v250 = vpop.f32.mrb[0].mxu0
    %251 = vmatprep.mubr.bf16.mxu0 0
    %252 = vmatmul.mubr.bf16.gmra.mrb[0].mxu0 %v127
    %v253 = vpop.f32.mrb[0].mxu0
    %v254 = vadd.f32 0.0, %v253
    %v255 = vpop.f32.mrb[0].mxu0
    %v256 = vpop.f32.mrb[0].mxu0
    %v257 = vadd.f32 0.0, %v256
    %v258 = vpop.f32.mrb[0].mxu0
    %259 = vmatprep.mubr.bf16.mxu0 0
    %260 = vmatmul.mubr.bf16.gmra.mrb[0].mxu0 %v128
    %v261 = vpop.f32.mrb[0].mxu0
    %v262 = vadd.f32 0.0, %v261
    %v263 = vpop.f32.mrb[0].mxu0
    %v264 = vpop.f32.mrb[0].mxu0
    %v265 = vadd.f32 0.0, %v264
    %v266 = vpop.f32.mrb[0].mxu0
    %267 = vmatprep.mubr.bf16.mxu0 0
    %268 = vmatmul.mubr.bf16.gmra.mrb[0].mxu0 %v129
    %v269 = vpop.f32.mrb[0].mxu0
    %v270 = vadd.f32 0.0, %v269
    %v271 = vpop.f32.mrb[0].mxu0
    %v272 = vpop.f32.mrb[0].mxu0
    %v273 = vadd.f32 0.0, %v272
    %v274 = vpop.f32.mrb[0].mxu0
    %275 = vmatprep.mubr.bf16.mxu0 0
    %276 = vmatmul.mubr.bf16.gmra.mrb[0].mxu0 %v130
    %v277 = vpop.f32.mrb[0].mxu0
    %v278 = vadd.f32 0.0, %v277
    %v279 = vpop.f32.mrb[0].mxu0
    %v280 = vpop.f32.mrb[0].mxu0
    %v281 = vadd.f32 0.0, %v280
    %v282 = vpop.f32.mrb[0].mxu0
    %283 = vdwg.mxu0
    %v284 = vpack.c.bf16 %v225, %v222
    %v285 = vpack.c.bf16 %v233, %v230
    %v286 = vpack.c.bf16 %v241, %v238
    %v287 = vpack.c.bf16 %v249, %v246
    %v288 = vpack.c.bf16 %v257, %v254
    %v289 = vpack.c.bf16 %v265, %v262
    %v290 = vpack.c.bf16 %v273, %v270
    %v291 = vpack.c.bf16 %v281, %v278
    %v292 = vld [vmem:[%s2] sm:$0xf]
    %v293 = vld [vmem:[%s3] sm:$0xf]
    %vm294 = vcmask 64512
    %v296 = vsel %vm294, %v171, 0
    %v299 = vsel %vm294, %v172, 0
    %v302 = vsel %vm294, %v173, 0
    %v305 = vsel %vm294, %v174, 0
    %v308 = vsel %vm294, %v175, 0
    %v311 = vsel %vm294, %v176, 0
    %v314 = vsel %vm294, %v177, 0
    %v317 = vsel %vm294, %v178, 0
    %vm319 = vcmask 1043456
    %v321 = vsel %vm319, %v293, 0
    %323 = vmatprep.subr.bf16.mxu0 0
    %324 = vmatpush1.bf16.msra.mxu0 %v321
    %325 = vmatprep.subr.bf16.mxu0 0
    %326 = vmatpush1.bf16.msra.mxu0 0
    %327 = vmatprep.subr.bf16.mxu0 0
    %328 = vmatpush1.bf16.msra.mxu0 0
    %329 = vmatprep.subr.bf16.mxu0 0
    %330 = vmatpush1.bf16.msra.mxu0 0
    %331 = vmatprep.subr.bf16.mxu0 0
    %332 = vmatpush1.bf16.msra.mxu0 0
    %333 = vmatprep.subr.bf16.mxu0 0
    %334 = vmatpush1.bf16.msra.mxu0 0
    %335 = vmatprep.subr.bf16.mxu0 0
    %336 = vmatpush1.bf16.msra.mxu0 0
    %337 = vmatprep.subr.bf16.mxu0 0
    %338 = vmatpush1.bf16.msra.mxu0 0
    %339 = vmatprep.subr.bf16.mxu0 0
    %340 = vmatpush1.bf16.msra.mxu0 0
    %341 = vmatprep.subr.bf16.mxu0 0
    %342 = vmatpush1.bf16.msra.mxu0 0
    %343 = vmatprep.subr.bf16.mxu0 0
    %344 = vmatpush1.bf16.msra.mxu0 0
    %345 = vmatprep.subr.bf16.mxu0 0
    %346 = vmatpush1.bf16.msra.mxu0 0
    %347 = vmatprep.subr.bf16.mxu0 0
    %348 = vmatpush1.bf16.msra.mxu0 0
    %349 = vmatprep.subr.bf16.mxu0 0
    %350 = vmatpush1.bf16.msra.mxu0 0
    %351 = vmatprep.subr.bf16.mxu0 0
    %352 = vmatpush1.bf16.msra.mxu0 0
    %353 = vmatprep.subr.bf16.mxu0 0
    %354 = vmatpush1.bf16.msra.mxu0 0
    %355 = vmatprep.mubr.bf16.mxu0 0
    %356 = vmatmul.mubr.bf16.gmra.mrb[0].mxu0 %v296
    %v357 = vpop.f32.mrb[0].mxu0
    %v358 = vadd.f32 0.0, %v357
    %v359 = vpop.f32.mrb[0].mxu0
    %v360 = vpop.f32.mrb[0].mxu0
    %v361 = vadd.f32 0.0, %v360
    %v362 = vpop.f32.mrb[0].mxu0
    %363 = vmatprep.mubr.bf16.mxu0 0
    %364 = vmatmul.mubr.bf16.gmra.mrb[0].mxu0 %v299
    %v365 = vpop.f32.mrb[0].mxu0
    %v366 = vadd.f32 0.0, %v365
    %v367 = vpop.f32.mrb[0].mxu0
    %v368 = vpop.f32.mrb[0].mxu0
    %v369 = vadd.f32 0.0, %v368
    %v370 = vpop.f32.mrb[0].mxu0
    %371 = vmatprep.mubr.bf16.mxu0 0
    %372 = vmatmul.mubr.bf16.gmra.mrb[0].mxu0 %v302
    %v373 = vpop.f32.mrb[0].mxu0
    %v374 = vadd.f32 0.0, %v373
    %v375 = vpop.f32.mrb[0].mxu0
    %v376 = vpop.f32.mrb[0].mxu0
    %v377 = vadd.f32 0.0, %v376
    %v378 = vpop.f32.mrb[0].mxu0
    %379 = vmatprep.mubr.bf16.mxu0 0
    %380 = vmatmul.mubr.bf16.gmra.mrb[0].mxu0 %v305
    %v381 = vpop.f32.mrb[0].mxu0
    %v382 = vadd.f32 0.0, %v381
    %v383 = vpop.f32.mrb[0].mxu0
    %v384 = vpop.f32.mrb[0].mxu0
    %v385 = vadd.f32 0.0, %v384
    %v386 = vpop.f32.mrb[0].mxu0
    %387 = vmatprep.mubr.bf16.mxu0 0
    %388 = vmatmul.mubr.bf16.gmra.mrb[0].mxu0 %v308
    %v389 = vpop.f32.mrb[0].mxu0
    %v390 = vadd.f32 0.0, %v389
    %v391 = vpop.f32.mrb[0].mxu0
    %v392 = vpop.f32.mrb[0].mxu0
    %v393 = vadd.f32 0.0, %v392
    %v394 = vpop.f32.mrb[0].mxu0
    %395 = vmatprep.mubr.bf16.mxu0 0
    %396 = vmatmul.mubr.bf16.gmra.mrb[0].mxu0 %v311
    %v397 = vpop.f32.mrb[0].mxu0
    %v398 = vadd.f32 0.0, %v397
    %v399 = vpop.f32.mrb[0].mxu0
    %v400 = vpop.f32.mrb[0].mxu0
    %v401 = vadd.f32 0.0, %v400
    %v402 = vpop.f32.mrb[0].mxu0
    %403 = vmatprep.mubr.bf16.mxu0 0
    %404 = vmatmul.mubr.bf16.gmra.mrb[0].mxu0 %v314
    %v405 = vpop.f32.mrb[0].mxu0
    %v406 = vadd.f32 0.0, %v405
    %v407 = vpop.f32.mrb[0].mxu0
    %v408 = vpop.f32.mrb[0].mxu0
    %v409 = vadd.f32 0.0, %v408
    %v410 = vpop.f32.mrb[0].mxu0
    %411 = vmatprep.mubr.bf16.mxu0 0
    %412 = vmatmul.mubr.bf16.gmra.mrb[0].mxu0 %v317
    %v413 = vpop.f32.mrb[0].mxu0
    %v414 = vadd.f32 0.0, %v413
    %v415 = vpop.f32.mrb[0].mxu0
    %v416 = vpop.f32.mrb[0].mxu0
    %v417 = vadd.f32 0.0, %v416
    %v418 = vpop.f32.mrb[0].mxu0
    %419 = vdwg.mxu0
    %v421 = vsel %vm294, %v284, 0
    %v424 = vsel %vm294, %v285, 0
    %v427 = vsel %vm294, %v286, 0
    %v430 = vsel %vm294, %v287, 0
    %v433 = vsel %vm294, %v288, 0
    %v436 = vsel %vm294, %v289, 0
    %v439 = vsel %vm294, %v290, 0
    %v442 = vsel %vm294, %v291, 0
    %v445 = vsel %vm319, %v292, 0
    %447 = vmatprep.subr.bf16.mxu0 0
    %448 = vmatpush1.bf16.msra.mxu0 %v445
    %449 = vmatprep.subr.bf16.mxu0 0
    %450 = vmatpush1.bf16.msra.mxu0 0
    %451 = vmatprep.subr.bf16.mxu0 0
    %452 = vmatpush1.bf16.msra.mxu0 0
    %453 = vmatprep.subr.bf16.mxu0 0
    %454 = vmatpush1.bf16.msra.mxu0 0
    %455 = vmatprep.subr.bf16.mxu0 0
    %456 = vmatpush1.bf16.msra.mxu0 0
    %457 = vmatprep.subr.bf16.mxu0 0
    %458 = vmatpush1.bf16.msra.mxu0 0
    %459 = vmatprep.subr.bf16.mxu0 0
    %460 = vmatpush1.bf16.msra.mxu0 0
    %461 = vmatprep.subr.bf16.mxu0 0
    %462 = vmatpush1.bf16.msra.mxu0 0
    %463 = vmatprep.subr.bf16.mxu0 0
    %464 = vmatpush1.bf16.msra.mxu0 0
    %465 = vmatprep.subr.bf16.mxu0 0
    %466 = vmatpush1.bf16.msra.mxu0 0
    %467 = vmatprep.subr.bf16.mxu0 0
    %468 = vmatpush1.bf16.msra.mxu0 0
    %469 = vmatprep.subr.bf16.mxu0 0
    %470 = vmatpush1.bf16.msra.mxu0 0
    %471 = vmatprep.subr.bf16.mxu0 0
    %472 = vmatpush1.bf16.msra.mxu0 0
    %473 = vmatprep.subr.bf16.mxu0 0
    %474 = vmatpush1.bf16.msra.mxu0 0
    %475 = vmatprep.subr.bf16.mxu0 0
    %476 = vmatpush1.bf16.msra.mxu0 0
    %477 = vmatprep.subr.bf16.mxu0 0
    %478 = vmatpush1.bf16.msra.mxu0 0
    %479 = vmatprep.mubr.bf16.mxu0 0
    %480 = vmatmul.mubr.bf16.gmra.mrb[0].mxu0 %v421
    %v481 = vpop.f32.mrb[0].mxu0
    %v482 = vadd.f32 %v358, %v481
    %v483 = vpop.f32.mrb[0].mxu0
    %v484 = vpop.f32.mrb[0].mxu0
    %v485 = vadd.f32 %v361, %v484
    %v486 = vpop.f32.mrb[0].mxu0
    %487 = vmatprep.mubr.bf16.mxu0 0
    %488 = vmatmul.mubr.bf16.gmra.mrb[0].mxu0 %v424
    %v489 = vpop.f32.mrb[0].mxu0
    %v490 = vadd.f32 %v366, %v489
    %v491 = vpop.f32.mrb[0].mxu0
    %v492 = vpop.f32.mrb[0].mxu0
    %v493 = vadd.f32 %v369, %v492
    %v494 = vpop.f32.mrb[0].mxu0
    %495 = vmatprep.mubr.bf16.mxu0 0
    %496 = vmatmul.mubr.bf16.gmra.mrb[0].mxu0 %v427
    %v497 = vpop.f32.mrb[0].mxu0
    %v498 = vadd.f32 %v374, %v497
    %v499 = vpop.f32.mrb[0].mxu0
    %v500 = vpop.f32.mrb[0].mxu0
    %v501 = vadd.f32 %v377, %v500
    %v502 = vpop.f32.mrb[0].mxu0
    %503 = vmatprep.mubr.bf16.mxu0 0
    %504 = vmatmul.mubr.bf16.gmra.mrb[0].mxu0 %v430
    %v505 = vpop.f32.mrb[0].mxu0
    %v506 = vadd.f32 %v382, %v505
    %v507 = vpop.f32.mrb[0].mxu0
    %v508 = vpop.f32.mrb[0].mxu0
    %v509 = vadd.f32 %v385, %v508
    %v510 = vpop.f32.mrb[0].mxu0
    %511 = vmatprep.mubr.bf16.mxu0 0
    %512 = vmatmul.mubr.bf16.gmra.mrb[0].mxu0 %v433
    %v513 = vpop.f32.mrb[0].mxu0
    %v514 = vadd.f32 %v390, %v513
    %v515 = vpop.f32.mrb[0].mxu0
    %v516 = vpop.f32.mrb[0].mxu0
    %v517 = vadd.f32 %v393, %v516
    %v518 = vpop.f32.mrb[0].mxu0
    %519 = vmatprep.mubr.bf16.mxu0 0
    %520 = vmatmul.mubr.bf16.gmra.mrb[0].mxu0 %v436
    %v521 = vpop.f32.mrb[0].mxu0
    %v522 = vadd.f32 %v398, %v521
    %v523 = vpop.f32.mrb[0].mxu0
    %v524 = vpop.f32.mrb[0].mxu0
    %v525 = vadd.f32 %v401, %v524
    %v526 = vpop.f32.mrb[0].mxu0
    %527 = vmatprep.mubr.bf16.mxu0 0
    %528 = vmatmul.mubr.bf16.gmra.mrb[0].mxu0 %v439
    %v529 = vpop.f32.mrb[0].mxu0
    %v530 = vadd.f32 %v406, %v529
    %v531 = vpop.f32.mrb[0].mxu0
    %v532 = vpop.f32.mrb[0].mxu0
    %v533 = vadd.f32 %v409, %v532
    %v534 = vpop.f32.mrb[0].mxu0
    %535 = vmatprep.mubr.bf16.mxu0 0
    %536 = vmatmul.mubr.bf16.gmra.mrb[0].mxu0 %v442
    %v537 = vpop.f32.mrb[0].mxu0
    %v538 = vadd.f32 %v414, %v537
    %v539 = vpop.f32.mrb[0].mxu0
    %v540 = vpop.f32.mrb[0].mxu0
    %v541 = vadd.f32 %v417, %v540
    %v542 = vpop.f32.mrb[0].mxu0
    %543 = vdwg.mxu0
    %v544 = vld [vmem:[%s4] sm:$0x1]
    %v546 = vlaneseq
    %v547 = vshrl.u32 %v546, 7
    %v548 = vsub.s32 0, %v547
    %v549 = vrot.slane %v544, %v548
    %v551 = vadd.f32 %v482, %v549
    %v552 = vadd.f32 %v485, %v549
    %v553 = vadd.f32 %v490, %v549
    %v554 = vadd.f32 %v493, %v549
    %v555 = vadd.f32 %v498, %v549
    %v556 = vadd.f32 %v501, %v549
    %v557 = vadd.f32 %v506, %v549
    %v558 = vadd.f32 %v509, %v549
    %v559 = vadd.f32 %v514, %v549
    %v560 = vadd.f32 %v517, %v549
    %v561 = vadd.f32 %v522, %v549
    %v562 = vadd.f32 %v525, %v549
    %v563 = vadd.f32 %v530, %v549
    %v564 = vadd.f32 %v533, %v549
    %v565 = vadd.f32 %v538, %v549
    %v566 = vadd.f32 %v541, %v549
    %v567 = vmax.f32 %v551, 0.0
    %v568 = vmax.f32 %v552, 0.0
    %v569 = vmax.f32 %v553, 0.0
    %v570 = vmax.f32 %v554, 0.0
    %v571 = vmax.f32 %v555, 0.0
    %v572 = vmax.f32 %v556, 0.0
    %v573 = vmax.f32 %v557, 0.0
    %v574 = vmax.f32 %v558, 0.0
    %v575 = vmax.f32 %v559, 0.0
    %v576 = vmax.f32 %v560, 0.0
    %v577 = vmax.f32 %v561, 0.0
    %v578 = vmax.f32 %v562, 0.0
    %v579 = vmax.f32 %v563, 0.0
    %v580 = vmax.f32 %v564, 0.0
    %v581 = vmax.f32 %v565, 0.0
    %v582 = vmax.f32 %v566, 0.0
    %v583 = vpack.c.bf16 %v568, %v567
    %v584 = vpack.c.bf16 %v570, %v569
    %v585 = vpack.c.bf16 %v572, %v571
    %v586 = vpack.c.bf16 %v574, %v573
    %v587 = vpack.c.bf16 %v576, %v575
    %v588 = vpack.c.bf16 %v578, %v577
    %v589 = vpack.c.bf16 %v580, %v579
    %v590 = vpack.c.bf16 %v582, %v581
    %591 = vmatprep.subr.bf16.mxu0 0
    %592 = vmatpush1.bf16.msra.mxu0 %v583
    %593 = vmatprep.subr.bf16.mxu0 0
    %594 = vmatpush1.bf16.msra.mxu0 %v584
    %595 = vmatprep.subr.bf16.mxu0 0
    %596 = vmatpush1.bf16.msra.mxu0 %v585
    %597 = vmatprep.subr.bf16.mxu0 0
    %598 = vmatpush1.bf16.msra.mxu0 %v586
    %599 = vmatprep.subr.bf16.mxu0 0
    %600 = vmatpush1.bf16.msra.mxu0 %v587
    %601 = vmatprep.subr.bf16.mxu0 0
    %602 = vmatpush1.bf16.msra.mxu0 %v588
    %603 = vmatprep.subr.bf16.mxu0 0
    %604 = vmatpush1.bf16.msra.mxu0 %v589
    %605 = vmatprep.subr.bf16.mxu0 0
    %606 = vmatpush1.bf16.msra.mxu0 %v590
    %607 = vmatprep.subr.bf16.mxu0 0
    %608 = vmatpush1.bf16.msra.mxu0 0
    %609 = vmatprep.subr.bf16.mxu0 0
    %610 = vmatpush1.bf16.msra.mxu0 0
    %611 = vmatprep.subr.bf16.mxu0 0
    %612 = vmatpush1.bf16.msra.mxu0 0
    %613 = vmatprep.subr.bf16.mxu0 0
    %614 = vmatpush1.bf16.msra.mxu0 0
    %615 = vmatprep.subr.bf16.mxu0 0
    %616 = vmatpush1.bf16.msra.mxu0 0
    %617 = vmatprep.subr.bf16.mxu0 0
    %618 = vmatpush1.bf16.msra.mxu0 0
    %619 = vmatprep.subr.bf16.mxu0 0
    %620 = vmatpush1.bf16.msra.mxu0 0
    %621 = vmatprep.subr.bf16.mxu0 0
    %622 = vmatpush1.bf16.msra.mxu0 0
    %623 = vmatprep.mubr.bf16.mxu0 0
    %624 = vmatmul.mubr.bf16.gmra.mrb[0].mxu0 %v123
    %v625 = vpop.f32.mrb[0].mxu0
    %v626 = vadd.f32 0.0, %v625
    %v627 = vpop.f32.mrb[0].mxu0
    %v628 = vpop.f32.mrb[0].mxu0
    %v629 = vadd.f32 0.0, %v628
    %v630 = vpop.f32.mrb[0].mxu0
    %631 = vmatprep.mubr.bf16.mxu0 0
    %632 = vmatmul.mubr.bf16.gmra.mrb[0].mxu0 %v124
    %v633 = vpop.f32.mrb[0].mxu0
    %v634 = vadd.f32 0.0, %v633
    %v635 = vpop.f32.mrb[0].mxu0
    %v636 = vpop.f32.mrb[0].mxu0
    %v637 = vadd.f32 0.0, %v636
    %v638 = vpop.f32.mrb[0].mxu0
    %639 = vmatprep.mubr.bf16.mxu0 0
    %640 = vmatmul.mubr.bf16.gmra.mrb[0].mxu0 %v125
    %v641 = vpop.f32.mrb[0].mxu0
    %v642 = vadd.f32 0.0, %v641
    %v643 = vpop.f32.mrb[0].mxu0
    %v644 = vpop.f32.mrb[0].mxu0
    %v645 = vadd.f32 0.0, %v644
    %v646 = vpop.f32.mrb[0].mxu0
    %647 = vmatprep.mubr.bf16.mxu0 0
    %648 = vmatmul.mubr.bf16.gmra.mrb[0].mxu0 %v126
    %v649 = vpop.f32.mrb[0].mxu0
    %v650 = vadd.f32 0.0, %v649
    %v651 = vpop.f32.mrb[0].mxu0
    %v652 = vpop.f32.mrb[0].mxu0
    %v653 = vadd.f32 0.0, %v652
    %v654 = vpop.f32.mrb[0].mxu0
    %655 = vmatprep.mubr.bf16.mxu0 0
    %656 = vmatmul.mubr.bf16.gmra.mrb[0].mxu0 %v127
    %v657 = vpop.f32.mrb[0].mxu0
    %v658 = vadd.f32 0.0, %v657
    %v659 = vpop.f32.mrb[0].mxu0
    %v660 = vpop.f32.mrb[0].mxu0
    %v661 = vadd.f32 0.0, %v660
    %v662 = vpop.f32.mrb[0].mxu0
    %663 = vmatprep.mubr.bf16.mxu0 0
    %664 = vmatmul.mubr.bf16.gmra.mrb[0].mxu0 %v128
    %v665 = vpop.f32.mrb[0].mxu0
    %v666 = vadd.f32 0.0, %v665
    %v667 = vpop.f32.mrb[0].mxu0
    %v668 = vpop.f32.mrb[0].mxu0
    %v669 = vadd.f32 0.0, %v668
    %v670 = vpop.f32.mrb[0].mxu0
    %671 = vmatprep.mubr.bf16.mxu0 0
    %672 = vmatmul.mubr.bf16.gmra.mrb[0].mxu0 %v129
    %v673 = vpop.f32.mrb[0].mxu0
    %v674 = vadd.f32 0.0, %v673
    %v675 = vpop.f32.mrb[0].mxu0
    %v676 = vpop.f32.mrb[0].mxu0
    %v677 = vadd.f32 0.0, %v676
    %v678 = vpop.f32.mrb[0].mxu0
    %679 = vmatprep.mubr.bf16.mxu0 0
    %680 = vmatmul.mubr.bf16.gmra.mrb[0].mxu0 %v130
    %v681 = vpop.f32.mrb[0].mxu0
    %v682 = vadd.f32 0.0, %v681
    %v683 = vpop.f32.mrb[0].mxu0
    %v684 = vpop.f32.mrb[0].mxu0
    %v685 = vadd.f32 0.0, %v684
    %v686 = vpop.f32.mrb[0].mxu0
    %687 = vdwg.mxu0
    %v688 = vpack.c.bf16 %v629, %v626
    %v689 = vpack.c.bf16 %v637, %v634
    %v690 = vpack.c.bf16 %v645, %v642
    %v691 = vpack.c.bf16 %v653, %v650
    %v692 = vpack.c.bf16 %v661, %v658
    %v693 = vpack.c.bf16 %v669, %v666
    %v694 = vpack.c.bf16 %v677, %v674
    %v695 = vpack.c.bf16 %v685, %v682
    %v696 = vld [vmem:[#allocation2] sm:$0xf]
    %v697 = vld [vmem:[#allocation2 + $0x4] sm:$0xf]
    %v698 = vld [vmem:[#allocation2 + $0x8] sm:$0xf]
    %v699 = vld [vmem:[#allocation2 + $0xc] sm:$0xf]
    %v700 = vld [vmem:[#allocation2 + $0x10] sm:$0xf]
    %v701 = vld [vmem:[#allocation2 + $0x14] sm:$0xf]
    %v702 = vld [vmem:[#allocation2 + $0x18] sm:$0xf]
    %v703 = vld [vmem:[#allocation2 + $0x1c] sm:$0xf]
    %v704 = vld [vmem:[#allocation2 + $0x20] sm:$0xf]
    %v705 = vld [vmem:[#allocation2 + $0x24] sm:$0xf]
    %v706 = vld [vmem:[#allocation2 + $0x28] sm:$0xf]
    %v707 = vld [vmem:[#allocation2 + $0x2c] sm:$0xf]
    %v708 = vld [vmem:[#allocation2 + $0x30] sm:$0xf]
    %v709 = vld [vmem:[#allocation2 + $0x34] sm:$0xf]
    %v710 = vld [vmem:[#allocation2 + $0x38] sm:$0xf]
    %v711 = vld [vmem:[#allocation2 + $0x3c] sm:$0xf]
    %v712 = vld [vmem:[#allocation5] sm:$0xf]
    %v713 = vld [vmem:[#allocation5 + $0x4] sm:$0xf]
    %v714 = vld [vmem:[#allocation5 + $0x8] sm:$0xf]
    %v715 = vld [vmem:[#allocation5 + $0xc] sm:$0xf]
    %v716 = vld [vmem:[#allocation5 + $0x10] sm:$0xf]
    %v717 = vld [vmem:[#allocation5 + $0x14] sm:$0xf]
    %v718 = vld [vmem:[#allocation5 + $0x18] sm:$0xf]
    %v719 = vld [vmem:[#allocation5 + $0x1c] sm:$0xf]
    %v720 = vld [vmem:[#allocation5 + $0x20] sm:$0xf]
    %v721 = vld [vmem:[#allocation5 + $0x24] sm:$0xf]
    %v722 = vld [vmem:[#allocation5 + $0x28] sm:$0xf]
    %v723 = vld [vmem:[#allocation5 + $0x2c] sm:$0xf]
    %v724 = vld [vmem:[#allocation5 + $0x30] sm:$0xf]
    %v725 = vld [vmem:[#allocation5 + $0x34] sm:$0xf]
    %v726 = vld [vmem:[#allocation5 + $0x38] sm:$0xf]
    %v727 = vld [vmem:[#allocation5 + $0x3c] sm:$0xf]
    %v744 = vunpack.c.l.b16 %v712
    %v745 = vunpack.c.l.b16 %v713
    %v746 = vunpack.c.l.b16 %v714
    %v747 = vunpack.c.l.b16 %v715
    %v748 = vunpack.c.l.b16 %v716
    %v749 = vunpack.c.l.b16 %v717
    %v750 = vunpack.c.l.b16 %v718
    %v751 = vunpack.c.l.b16 %v719
    %v752 = vunpack.c.l.b16 %v720
    %v753 = vunpack.c.l.b16 %v721
    %v754 = vunpack.c.l.b16 %v722
    %v755 = vunpack.c.l.b16 %v723
    %v756 = vunpack.c.l.b16 %v724
    %v757 = vunpack.c.l.b16 %v725
    %v758 = vunpack.c.l.b16 %v726
    %v759 = vunpack.c.l.b16 %v727
    %v760 = vpack.c.b16 %v745, %v744
    %v761 = vpack.c.b16 %v747, %v746
    %v762 = vpack.c.b16 %v749, %v748
    %v763 = vpack.c.b16 %v751, %v750
    %v764 = vpack.c.b16 %v753, %v752
    %v765 = vpack.c.b16 %v755, %v754
    %v766 = vpack.c.b16 %v757, %v756
    %v767 = vpack.c.b16 %v759, %v758
    %776 = vmatprep.subr.bf16.mxu0 0
    %777 = vmatpush1.bf16.msra.mxu0 %v760
    %778 = vmatprep.subr.bf16.mxu0 0
    %779 = vmatpush1.bf16.msra.mxu0 %v761
    %780 = vmatprep.subr.bf16.mxu0 0
    %781 = vmatpush1.bf16.msra.mxu0 %v762
    %782 = vmatprep.subr.bf16.mxu0 0
    %783 = vmatpush1.bf16.msra.mxu0 %v763
    %784 = vmatprep.subr.bf16.mxu0 0
    %785 = vmatpush1.bf16.msra.mxu0 %v764
    %786 = vmatprep.subr.bf16.mxu0 0
    %787 = vmatpush1.bf16.msra.mxu0 %v765
    %788 = vmatprep.subr.bf16.mxu0 0
    %789 = vmatpush1.bf16.msra.mxu0 %v766
    %790 = vmatprep.subr.bf16.mxu0 0
    %791 = vmatpush1.bf16.msra.mxu0 %v767
    %792 = vmatprep.subr.bf16.mxu0 0
    %793 = vmatpush1.bf16.msra.mxu0 0
    %794 = vmatprep.subr.bf16.mxu0 0
    %795 = vmatpush1.bf16.msra.mxu0 0
    %796 = vmatprep.subr.bf16.mxu0 0
    %797 = vmatpush1.bf16.msra.mxu0 0
    %798 = vmatprep.subr.bf16.mxu0 0
    %799 = vmatpush1.bf16.msra.mxu0 0
    %800 = vmatprep.subr.bf16.mxu0 0
    %801 = vmatpush1.bf16.msra.mxu0 0
    %802 = vmatprep.subr.bf16.mxu0 0
    %803 = vmatpush1.bf16.msra.mxu0 0
    %804 = vmatprep.subr.bf16.mxu0 0
    %805 = vmatpush1.bf16.msra.mxu0 0
    %806 = vmatprep.subr.bf16.mxu0 0
    %807 = vmatpush1.bf16.msra.mxu0 0
    %808 = vmatprep.mubr.bf16.mxu0 0
    %809 = vmatmul.mubr.bf16.gmra.mrb[0].mxu0 %v583
    %v810 = vpop.f32.mrb[0].mxu0
    %v811 = vadd.f32 0.0, %v810
    %v812 = vpop.f32.mrb[0].mxu0
    %v813 = vpop.f32.mrb[0].mxu0
    %v814 = vadd.f32 0.0, %v813
    %v815 = vpop.f32.mrb[0].mxu0
    %816 = vmatprep.mubr.bf16.mxu0 0
    %817 = vmatmul.mubr.bf16.gmra.mrb[0].mxu0 %v584
    %v818 = vpop.f32.mrb[0].mxu0
    %v819 = vadd.f32 0.0, %v818
    %v820 = vpop.f32.mrb[0].mxu0
    %v821 = vpop.f32.mrb[0].mxu0
    %v822 = vadd.f32 0.0, %v821
    %v823 = vpop.f32.mrb[0].mxu0
    %824 = vmatprep.mubr.bf16.mxu0 0
    %825 = vmatmul.mubr.bf16.gmra.mrb[0].mxu0 %v585
    %v826 = vpop.f32.mrb[0].mxu0
    %v827 = vadd.f32 0.0, %v826
    %v828 = vpop.f32.mrb[0].mxu0
    %v829 = vpop.f32.mrb[0].mxu0
    %v830 = vadd.f32 0.0, %v829
    %v831 = vpop.f32.mrb[0].mxu0
    %832 = vmatprep.mubr.bf16.mxu0 0
    %833 = vmatmul.mubr.bf16.gmra.mrb[0].mxu0 %v586
    %v834 = vpop.f32.mrb[0].mxu0
    %v835 = vadd.f32 0.0, %v834
    %v836 = vpop.f32.mrb[0].mxu0
    %v837 = vpop.f32.mrb[0].mxu0
    %v838 = vadd.f32 0.0, %v837
    %v839 = vpop.f32.mrb[0].mxu0
    %840 = vmatprep.mubr.bf16.mxu0 0
    %841 = vmatmul.mubr.bf16.gmra.mrb[0].mxu0 %v587
    %v842 = vpop.f32.mrb[0].mxu0
    %v843 = vadd.f32 0.0, %v842
    %v844 = vpop.f32.mrb[0].mxu0
    %v845 = vpop.f32.mrb[0].mxu0
    %v846 = vadd.f32 0.0, %v845
    %v847 = vpop.f32.mrb[0].mxu0
    %848 = vmatprep.mubr.bf16.mxu0 0
    %849 = vmatmul.mubr.bf16.gmra.mrb[0].mxu0 %v588
    %v850 = vpop.f32.mrb[0].mxu0
    %v851 = vadd.f32 0.0, %v850
    %v852 = vpop.f32.mrb[0].mxu0
    %v853 = vpop.f32.mrb[0].mxu0
    %v854 = vadd.f32 0.0, %v853
    %v855 = vpop.f32.mrb[0].mxu0
    %856 = vmatprep.mubr.bf16.mxu0 0
    %857 = vmatmul.mubr.bf16.gmra.mrb[0].mxu0 %v589
    %v858 = vpop.f32.mrb[0].mxu0
    %v859 = vadd.f32 0.0, %v858
    %v860 = vpop.f32.mrb[0].mxu0
    %v861 = vpop.f32.mrb[0].mxu0
    %v862 = vadd.f32 0.0, %v861
    %v863 = vpop.f32.mrb[0].mxu0
    %864 = vmatprep.mubr.bf16.mxu0 0
    %865 = vmatmul.mubr.bf16.gmra.mrb[0].mxu0 %v590
    %v866 = vpop.f32.mrb[0].mxu0
    %v867 = vadd.f32 0.0, %v866
    %v868 = vpop.f32.mrb[0].mxu0
    %v869 = vpop.f32.mrb[0].mxu0
    %v870 = vadd.f32 0.0, %v869
    %v871 = vpop.f32.mrb[0].mxu0
    %872 = vdwg.mxu0
    %v889 = vunpack.c.l.b16 %v696
    %v890 = vunpack.c.l.b16 %v697
    %v891 = vunpack.c.l.b16 %v698
    %v892 = vunpack.c.l.b16 %v699
    %v893 = vunpack.c.l.b16 %v700
    %v894 = vunpack.c.l.b16 %v701
    %v895 = vunpack.c.l.b16 %v702
    %v896 = vunpack.c.l.b16 %v703
    %v897 = vunpack.c.l.b16 %v704
    %v898 = vunpack.c.l.b16 %v705
    %v899 = vunpack.c.l.b16 %v706
    %v900 = vunpack.c.l.b16 %v707
    %v901 = vunpack.c.l.b16 %v708
    %v902 = vunpack.c.l.b16 %v709
    %v903 = vunpack.c.l.b16 %v710
    %v904 = vunpack.c.l.b16 %v711
    %v905 = vpack.c.b16 %v890, %v889
    %v906 = vpack.c.b16 %v892, %v891
    %v907 = vpack.c.b16 %v894, %v893
    %v908 = vpack.c.b16 %v896, %v895
    %v909 = vpack.c.b16 %v898, %v897
    %v910 = vpack.c.b16 %v900, %v899
    %v911 = vpack.c.b16 %v902, %v901
    %v912 = vpack.c.b16 %v904, %v903
    %921 = vmatprep.subr.bf16.mxu0 0
    %922 = vmatpush1.bf16.msra.mxu0 %v905
    %923 = vmatprep.subr.bf16.mxu0 0
    %924 = vmatpush1.bf16.msra.mxu0 %v906
    %925 = vmatprep.subr.bf16.mxu0 0
    %926 = vmatpush1.bf16.msra.mxu0 %v907
    %927 = vmatprep.subr.bf16.mxu0 0
    %928 = vmatpush1.bf16.msra.mxu0 %v908
    %929 = vmatprep.subr.bf16.mxu0 0
    %930 = vmatpush1.bf16.msra.mxu0 %v909
    %931 = vmatprep.subr.bf16.mxu0 0
    %932 = vmatpush1.bf16.msra.mxu0 %v910
    %933 = vmatprep.subr.bf16.mxu0 0
    %934 = vmatpush1.bf16.msra.mxu0 %v911
    %935 = vmatprep.subr.bf16.mxu0 0
    %936 = vmatpush1.bf16.msra.mxu0 %v912
    %937 = vmatprep.subr.bf16.mxu0 0
    %938 = vmatpush1.bf16.msra.mxu0 0
    %939 = vmatprep.subr.bf16.mxu0 0
    %940 = vmatpush1.bf16.msra.mxu0 0
    %941 = vmatprep.subr.bf16.mxu0 0
    %942 = vmatpush1.bf16.msra.mxu0 0
    %943 = vmatprep.subr.bf16.mxu0 0
    %944 = vmatpush1.bf16.msra.mxu0 0
    %945 = vmatprep.subr.bf16.mxu0 0
    %946 = vmatpush1.bf16.msra.mxu0 0
    %947 = vmatprep.subr.bf16.mxu0 0
    %948 = vmatpush1.bf16.msra.mxu0 0
    %949 = vmatprep.subr.bf16.mxu0 0
    %950 = vmatpush1.bf16.msra.mxu0 0
    %951 = vmatprep.subr.bf16.mxu0 0
    %952 = vmatpush1.bf16.msra.mxu0 0
    %953 = vmatprep.mubr.bf16.mxu0 0
    %954 = vmatmul.mubr.bf16.gmra.mrb[0].mxu0 %v688
    %v955 = vpop.f32.mrb[0].mxu0
    %v956 = vadd.f32 %v811, %v955
    %v957 = vpop.f32.mrb[0].mxu0
    %v958 = vpop.f32.mrb[0].mxu0
    %v959 = vadd.f32 %v814, %v958
    %v960 = vpop.f32.mrb[0].mxu0
    %961 = vmatprep.mubr.bf16.mxu0 0
    %962 = vmatmul.mubr.bf16.gmra.mrb[0].mxu0 %v689
    %v963 = vpop.f32.mrb[0].mxu0
    %v964 = vadd.f32 %v819, %v963
    %v965 = vpop.f32.mrb[0].mxu0
    %v966 = vpop.f32.mrb[0].mxu0
    %v967 = vadd.f32 %v822, %v966
    %v968 = vpop.f32.mrb[0].mxu0
    %969 = vmatprep.mubr.bf16.mxu0 0
    %970 = vmatmul.mubr.bf16.gmra.mrb[0].mxu0 %v690
    %v971 = vpop.f32.mrb[0].mxu0
    %v972 = vadd.f32 %v827, %v971
    %v973 = vpop.f32.mrb[0].mxu0
    %v974 = vpop.f32.mrb[0].mxu0
    %v975 = vadd.f32 %v830, %v974
    %v976 = vpop.f32.mrb[0].mxu0
    %977 = vmatprep.mubr.bf16.mxu0 0
    %978 = vmatmul.mubr.bf16.gmra.mrb[0].mxu0 %v691
    %v979 = vpop.f32.mrb[0].mxu0
    %v980 = vadd.f32 %v835, %v979
    %v981 = vpop.f32.mrb[0].mxu0
    %v982 = vpop.f32.mrb[0].mxu0
    %v983 = vadd.f32 %v838, %v982
    %v984 = vpop.f32.mrb[0].mxu0
    %985 = vmatprep.mubr.bf16.mxu0 0
    %986 = vmatmul.mubr.bf16.gmra.mrb[0].mxu0 %v692
    %v987 = vpop.f32.mrb[0].mxu0
    %v988 = vadd.f32 %v843, %v987
    %v989 = vpop.f32.mrb[0].mxu0
    %v990 = vpop.f32.mrb[0].mxu0
    %v991 = vadd.f32 %v846, %v990
    %v992 = vpop.f32.mrb[0].mxu0
    %993 = vmatprep.mubr.bf16.mxu0 0
    %994 = vmatmul.mubr.bf16.gmra.mrb[0].mxu0 %v693
    %v995 = vpop.f32.mrb[0].mxu0
    %v996 = vadd.f32 %v851, %v995
    %v997 = vpop.f32.mrb[0].mxu0
    %v998 = vpop.f32.mrb[0].mxu0
    %v999 = vadd.f32 %v854, %v998
    %v1000 = vpop.f32.mrb[0].mxu0
    %1001 = vmatprep.mubr.bf16.mxu0 0
    %1002 = vmatmul.mubr.bf16.gmra.mrb[0].mxu0 %v694
    %v1003 = vpop.f32.mrb[0].mxu0
    %v1004 = vadd.f32 %v859, %v1003
    %v1005 = vpop.f32.mrb[0].mxu0
    %v1006 = vpop.f32.mrb[0].mxu0
    %v1007 = vadd.f32 %v862, %v1006
    %v1008 = vpop.f32.mrb[0].mxu0
    %1009 = vmatprep.mubr.bf16.mxu0 0
    %1010 = vmatmul.mubr.bf16.gmra.mrb[0].mxu0 %v695
    %v1011 = vpop.f32.mrb[0].mxu0
    %v1012 = vadd.f32 %v867, %v1011
    %v1013 = vpop.f32.mrb[0].mxu0
    %v1014 = vpop.f32.mrb[0].mxu0
    %v1015 = vadd.f32 %v870, %v1014
    %v1016 = vpop.f32.mrb[0].mxu0
    %1017 = vdwg.mxu0
    %v1018 = vld [vmem:[%s7] sm:$0x1]
    %v1020 = vlaneseq
    %v1021 = vshrl.u32 %v1020, 7
    %v1022 = vsub.s32 0, %v1021
    %v1023 = vrot.slane %v1018, %v1022
    %v1025 = vadd.f32 %v956, %v1023
    %v1026 = vadd.f32 %v959, %v1023
    %v1027 = vadd.f32 %v964, %v1023
    %v1028 = vadd.f32 %v967, %v1023
    %v1029 = vadd.f32 %v972, %v1023
    %v1030 = vadd.f32 %v975, %v1023
    %v1031 = vadd.f32 %v980, %v1023
    %v1032 = vadd.f32 %v983, %v1023
    %v1033 = vadd.f32 %v988, %v1023
    %v1034 = vadd.f32 %v991, %v1023
    %v1035 = vadd.f32 %v996, %v1023
    %v1036 = vadd.f32 %v999, %v1023
    %v1037 = vadd.f32 %v1004, %v1023
    %v1038 = vadd.f32 %v1007, %v1023
    %v1039 = vadd.f32 %v1012, %v1023
    %v1040 = vadd.f32 %v1015, %v1023
    %1041 = vst [vmem:[#allocation7] sm:$0xff] %v1025
    %1042 = vst [vmem:[#allocation7 + $0x8] sm:$0xff] %v1026
    %1043 = vst [vmem:[#allocation7 + $0x10] sm:$0xff] %v1027
    %1044 = vst [vmem:[#allocation7 + $0x18] sm:$0xff] %v1028
    %1045 = vst [vmem:[#allocation7 + $0x20] sm:$0xff] %v1029
    %1046 = vst [vmem:[#allocation7 + $0x28] sm:$0xff] %v1030
    %1047 = vst [vmem:[#allocation7 + $0x30] sm:$0xff] %v1031
    %1048 = vst [vmem:[#allocation7 + $0x38] sm:$0xff] %v1032
    %1049 = vst [vmem:[#allocation7 + $0x40] sm:$0xff] %v1033
    %1050 = vst [vmem:[#allocation7 + $0x48] sm:$0xff] %v1034
    %1051 = vst [vmem:[#allocation7 + $0x50] sm:$0xff] %v1035
    %1052 = vst [vmem:[#allocation7 + $0x58] sm:$0xff] %v1036
    %1053 = vst [vmem:[#allocation7 + $0x60] sm:$0xff] %v1037
    %1054 = vst [vmem:[#allocation7 + $0x68] sm:$0xff] %v1038
    %1055 = vst [vmem:[#allocation7 + $0x70] sm:$0xff] %v1039
    %1056 = vst [vmem:[#allocation7 + $0x78] sm:$0xff] %v1040
    // Predicated region
    $region42: #{tpu_custom_call.1} parent=1 // pred_check
      _
    $region43: #{tpu_custom_call.1} parent=1 // pred_check_branch
      %1058 = sbr.rel (0) target = $region45
    $region44: #{tpu_custom_call.1} parent=1 // pred_region
      %s1060 = ssub.s32 2048, 2048
      %1061 = vsyncadd [#allocation4], %s1060
      %s1062 = sshll.u32 [#allocation7], 4
      %s1063 = int_to_ptr.vmem [resolvable:$true] %s1062
      %1068 = dma.vmem_to_hbm [thread:$0]  %s1063, 2048, %s8, [#allocation4], 128, 128, 8
    $region45: #{tpu_custom_call.1} parent=1 // pred_fallthru
      _
    // Predicated region
    $region46: #{tpu_custom_call.1} parent=1 // pred_check
      _
    $region47: #{tpu_custom_call.1} parent=1 // pred_check_branch
      %1070 = sbr.rel (0) target = $region49
    $region48: #{tpu_custom_call.1} parent=1 // pred_region
      %1071 = dma.done [#allocation4], 2048
    $region49: #{tpu_custom_call.1} parent=1 // pred_fallthru
      _
    %1072 = vsyncpa [#allocation3], 1
    %1073 = vsyncpa [#allocation6], 1
    %1074 = vsyncpa [#allocation4], 1

</llo_original>
